<compile_context>
chip_gen: v7x
topology: tpu7x:2x2x1
jax: 0.10.0
libtpu: 0.0.40
codegen_flags: <defaults>
</compile_context>

<pallas_src>
import math

import jax
import jax.numpy as jnp
from jax import lax
from jax.experimental import pallas as pl
from jax.experimental.pallas import tpu as pltpu


# ---------------------------------------------------------------------------
# Kernels
# ---------------------------------------------------------------------------
def _le_kernel_ksplit(x_ref, w_ref, b_ref, y_ref, logits_ref, onehot_ref, acc_ref):
    """K-split path: grid (i, j, k) with f32 VMEM accumulator.

    x_ref: (tm, tk) bf16, w_ref: (tk, tn) bf16, b_ref: (1, tn) f32,
    y_ref: (tm, 1) i32, logits_ref: (tm, tn), onehot_ref: (tm, tn),
    acc_ref: (tm, tn) f32 scratch.
    """
    # Hoisted out of pl.when bodies (required for clean lowering).
    j = pl.program_id(1)
    k = pl.program_id(2)
    nk = pl.num_programs(2)

    @pl.when(k == 0)
    def _init():
        acc_ref[...] = jnp.zeros_like(acc_ref)

    # (tm, tk) @ (tk, tn) on the MXU, bf16 inputs, f32 accumulation.
    acc_ref[...] += lax.dot_general(
        x_ref[...],
        w_ref[...],
        dimension_numbers=(((1,), (0,)), ((), ())),
        preferred_element_type=jnp.float32,
    )

    @pl.when(k == nk - 1)
    def _finalize():
        # Bias added exactly once per output tile.
        logits_ref[...] = (acc_ref[...] + b_ref[...]).astype(logits_ref.dtype)
        # Identity-embedding lookup == one-hot(y); rides the same output DMA.
        tm, tn = onehot_ref.shape
        col = j * tn + lax.broadcasted_iota(jnp.int32, (tm, tn), 1)
        onehot_ref[...] = (col == y_ref[...]).astype(onehot_ref.dtype)


def _le_kernel_fullk(x_ref, w_ref, b_ref, y_ref, logits_ref, onehot_ref):
    """Single-K-tile path: grid (i, j), no accumulator scratch / branches."""
    j = pl.program_id(1)
    acc = lax.dot_general(
        x_ref[...],
        w_ref[...],
        dimension_numbers=(((1,), (0,)), ((), ())),
        preferred_element_type=jnp.float32,
    )
    logits_ref[...] = (acc + b_ref[...]).astype(logits_ref.dtype)
    tm, tn = logits_ref.shape
    col = j * tn + lax.broadcasted_iota(jnp.int32, (tm, tn), 1)
    onehot_ref[...] = (col == y_ref[...]).astype(onehot_ref.dtype)


# ---------------------------------------------------------------------------
# Tiling / VMEM helpers
# ---------------------------------------------------------------------------
def _round_up(x, m):
    return ((x + m - 1) // m) * m


def _tile_and_pad(dim, target):
    """If dim fits one target tile, use the full dim as block; else tile+pad."""
    if dim <= target:
        return dim, dim
    return target, _round_up(dim, target)


def _vmem_cap_bytes():
    """Generation-aware VMEM cap; conservative fallback fits every TPU gen."""
    try:
        return int(0.7 * pltpu.get_tpu_info().vmem_capacity_bytes)
    except Exception:
        return 48 * 1024 * 1024


# ---------------------------------------------------------------------------
# Padded pallas_call (inputs already padded to tile multiples)
# ---------------------------------------------------------------------------
def _label_embedding_padded_call(x_p, wT_p, b_p, y_p, *, tm, tn, tk,
                                 logits_dtype=jnp.float32,
                                 onehot_dtype=jnp.bfloat16):
    Np, Hp = x_p.shape
    HpW, Vp = wT_p.shape
    assert HpW == Hp
    assert Np % tm == 0 and Vp % tn == 0 and Hp % tk == 0
    grid_i, grid_j, nk = Np // tm, Vp // tn, Hp // tk

    in_sz = jnp.dtype(x_p.dtype).itemsize
    lg_sz = jnp.dtype(logits_dtype).itemsize
    oh_sz = jnp.dtype(onehot_dtype).itemsize

    # Double-buffered VMEM footprint: inputs + 2 outputs (+ acc scratch).
    vmem_bytes = (2 * (tm * tk + tk * tn) * in_sz
                  + 2 * (tn * 4 + tm * 4)
                  + 2 * tm * tn * (lg_sz + oh_sz)
                  + (tm * tn * 4 if nk > 1 else 0))
    vmem_limit = int(min(max(int(1.5 * vmem_bytes), 16 * 1024 * 1024),
                         _vmem_cap_bytes()))

    # Honest streaming estimate: x is re-read once per j block, W once per i.
    cost = pl.CostEstimate(
        flops=2 * Np * Vp * Hp,
        transcendentals=0,
        bytes_accessed=(Np * Hp * in_sz * grid_j
                        + Hp * Vp * in_sz * grid_i
                        + Vp * 4 * grid_i + Np * 4 * grid_j
                        + Np * Vp * (lg_sz + oh_sz)),
    )

    out_shape = (jax.ShapeDtypeStruct((Np, Vp), logits_dtype),
                 jax.ShapeDtypeStruct((Np, Vp), onehot_dtype))

    if nk == 1:
        kernel = _le_kernel_fullk
        grid = (grid_i, grid_j)
        in_specs = [
            pl.BlockSpec((tm, tk), lambda i, j: (i, 0)),   # x  (N, H)
            pl.BlockSpec((tk, tn), lambda i, j: (0, j)),   # W^T (H, V)
            pl.BlockSpec((1, tn), lambda i, j: (0, j)),    # bias
            pl.BlockSpec((tm, 1), lambda i, j: (i, 0)),    # y
        ]
        out_specs = (pl.BlockSpec((tm, tn), lambda i, j: (i, j)),
                     pl.BlockSpec((tm, tn), lambda i, j: (i, j)))
        scratch = []
        dims = ("parallel", "parallel")
    else:
        kernel = _le_kernel_ksplit
        grid = (grid_i, grid_j, nk)
        in_specs = [
            pl.BlockSpec((tm, tk), lambda i, j, k: (i, k)),   # x  (N, H)
            pl.BlockSpec((tk, tn), lambda i, j, k: (k, j)),   # W^T (H, V)
            pl.BlockSpec((1, tn), lambda i, j, k: (0, j)),    # bias
            pl.BlockSpec((tm, 1), lambda i, j, k: (i, 0)),    # y
        ]
        out_specs = (pl.BlockSpec((tm, tn), lambda i, j, k: (i, j)),
                     pl.BlockSpec((tm, tn), lambda i, j, k: (i, j)))
        scratch = [pltpu.VMEM((tm, tn), jnp.float32)]
        dims = ("parallel", "parallel", "arbitrary")

    return pl.pallas_call(
        kernel,
        out_shape=out_shape,
        grid_spec=pltpu.PrefetchScalarGridSpec(
            num_scalar_prefetch=0,
            grid=grid,
            in_specs=in_specs,
            out_specs=out_specs,
            scratch_shapes=scratch,
        ),
        compiler_params=pltpu.CompilerParams(
            dimension_semantics=dims,
            vmem_limit_bytes=vmem_limit,
        ),
        cost_estimate=cost,
    )(x_p, wT_p, b_p, y_p)


# ---------------------------------------------------------------------------
# Convenience wrapper (pads everything per call; used for testing odd shapes)
# ---------------------------------------------------------------------------
def label_embedding_forward(x2d, weight, bias, y_flat, *,
                            tm=1024, tn=1024, tk=512,
                            compute_dtype=jnp.bfloat16,
                            logits_dtype=jnp.float32,
                            onehot_dtype=jnp.bfloat16):
    """x2d: (N, H); weight: (V, H); bias: (V,); y_flat: (N,) int."""
    N, H = x2d.shape
    V, H2 = weight.shape
    assert H == H2
    tm, Np = _tile_and_pad(N, tm)
    tn, Vp = _tile_and_pad(V, tn)
    tk, Hp = _tile_and_pad(H, tk)

    # Padded K rows/cols are zeros (no matmul contribution); padded V cols
    # never match y (< V); padded N rows are sliced off below.
    x_p = jnp.pad(x2d.astype(compute_dtype), ((0, Np - N), (0, Hp - H)))
    wT_p = jnp.pad(weight.T.astype(compute_dtype), ((0, Hp - H), (0, Vp - V)))
    b_p = jnp.pad(bias.astype(jnp.float32), (0, Vp - V)).reshape(1, Vp)
    y_p = jnp.pad(y_flat.astype(jnp.int32), (0, Np - N)).reshape(Np, 1)

    logits_p, onehot_p = _label_embedding_padded_call(
        x_p, wT_p, b_p, y_p, tm=tm, tn=tn, tk=tk,
        logits_dtype=logits_dtype, onehot_dtype=onehot_dtype)
    return logits_p[:N, :V], onehot_p[:N, :V]


# ---------------------------------------------------------------------------
# Module wrapper
# ---------------------------------------------------------------------------
class LabelEmbeddingPallas:
    """Pallas port of label_embedding: (Linear(x.detach()), one_hot(y))."""

    def __init__(self, hidden_size, vocab_size, key, *,
                 tm=1024, tn=1024, tk=512,
                 compute_dtype=jnp.bfloat16,
                 logits_dtype=jnp.float32,
                 onehot_dtype=jnp.bfloat16):
        self.hidden_size = hidden_size
        self.vocab_size = vocab_size
        self.compute_dtype = compute_dtype
        self.logits_dtype = logits_dtype
        self.onehot_dtype = onehot_dtype

        kw, kb = jax.random.split(key)
        bound = 1.0 / math.sqrt(hidden_size)
        # nn.Linear(hidden_size, vocab_size): weight (V, H), bias (V,) in f32.
        self.weight = jax.random.uniform(
            kw, (vocab_size, hidden_size), jnp.float32, -bound, bound)
        self.bias = jax.random.uniform(
            kb, (vocab_size,), jnp.float32, -bound, bound)

        # One-time prep (not per forward): transpose to (H, V), cast to bf16,
        # pad to tile multiples.  Embedding weight is identity -> one-hot is
        # computed in-kernel, no table materialized.
        self.tm_target = tm
        self.tn, self.Vp = _tile_and_pad(vocab_size, tn)
        self.tk, self.Hp = _tile_and_pad(hidden_size, tk)
        self.wT_p = jnp.pad(self.weight.T.astype(compute_dtype),
                            ((0, self.Hp - hidden_size),
                             (0, self.Vp - vocab_size)))
        self.b_p = jnp.pad(self.bias,
                           (0, self.Vp - vocab_size)).reshape(1, self.Vp)

    def __call__(self, outputs, y):
        # outputs: [B, S, H]; y: [B, S].  (.detach() only affects gradients —
        # a no-op for the forward values computed here.)
        B, S, H = outputs.shape
        assert H == self.hidden_size
        N, V = B * S, self.vocab_size

        tm, Np = _tile_and_pad(N, self.tm_target)
        x_p = jnp.pad(outputs.reshape(N, H).astype(self.compute_dtype),
                      ((0, Np - N), (0, self.Hp - H)))
        y_p = jnp.pad(y.reshape(N).astype(jnp.int32),
                      (0, Np - N)).reshape(Np, 1)

        logits_p, onehot_p = _label_embedding_padded_call(
            x_p, self.wT_p, self.b_p, y_p,
            tm=tm, tn=self.tn, tk=self.tk,
            logits_dtype=self.logits_dtype, onehot_dtype=self.onehot_dtype)

        logits = logits_p[:N, :V].reshape(B, S, V)
        onehot = onehot_p[:N, :V].reshape(B, S, V)
        return logits, onehot


if __name__ == "__main__":
    # ---- small demo at module-consistent shapes ----
    hidden_size, vocab_size = 32, 128
    batch, seq = 2, 8

    key = jax.random.PRNGKey(0)
    k_param, k_x, k_y, k_x2, k_y2, k_w2, k_b2 = jax.random.split(key, 7)

    model = LabelEmbeddingPallas(hidden_size, vocab_size, k_param)
    outputs = jax.random.normal(k_x, (batch, seq, hidden_size), jnp.float32)
    y = jax.random.randint(k_y, (batch, seq), 0, vocab_size, jnp.int32)

    logits, emb = model(outputs, y)
    jax.block_until_ready((logits, emb))

    # Reference: f32 math on the same bf16-rounded operands the kernel consumes.
    xb = outputs.reshape(-1, hidden_size).astype(jnp.bfloat16).astype(jnp.float32)
    wb = model.weight.astype(jnp.bfloat16).astype(jnp.float32)
    ref_logits = (xb @ wb.T + model.bias).reshape(batch, seq, vocab_size)
    ref_emb = jax.nn.one_hot(y, vocab_size, dtype=jnp.float32)
    assert jnp.allclose(logits, ref_logits, atol=2e-3, rtol=2e-3)
    assert jnp.allclose(emb.astype(jnp.float32), ref_emb)

    # ---- secondary test: padding + multi-tile i/j/k accumulation path ----
    N2, H2, V2 = 20, 256, 320          # pads to (32, 256, 384), grid (2, 3, 2)
    x2 = jax.random.normal(k_x2, (N2, H2), jnp.float32)
    y2 = jax.random.randint(k_y2, (N2,), 0, V2, jnp.int32)
    w2 = jax.random.normal(k_w2, (V2, H2), jnp.float32) * 0.05
    b2 = jax.random.normal(k_b2, (V2,), jnp.float32) * 0.05

    lg2, oh2 = label_embedding_forward(x2, w2, b2, y2, tm=16, tn=128, tk=128)
    jax.block_until_ready((lg2, oh2))

    x2b = x2.astype(jnp.bfloat16).astype(jnp.float32)
    w2b = w2.astype(jnp.bfloat16).astype(jnp.float32)
    ref2 = x2b @ w2b.T + b2
    assert jnp.allclose(lg2, ref2, atol=5e-3, rtol=5e-3)
    assert jnp.allclose(oh2.astype(jnp.float32),
                        jax.nn.one_hot(y2, V2, dtype=jnp.float32))

    print("KERNEL_OK")
</pallas_src>

<mosaic_0001>
module attributes {stable_mosaic.version = 11 : i64} {
  func.func @_le_kernel_fullk(%arg0: i32, %arg1: i32, %arg2: memref<16x32xbf16, #tpu.memory_space<vmem>>, %arg3: memref<32x128xbf16, #tpu.memory_space<vmem>>, %arg4: memref<1x128xf32, #tpu.memory_space<vmem>>, %arg5: memref<16x1xi32, #tpu.memory_space<vmem>>, %arg6: memref<16x128xf32, #tpu.memory_space<vmem>>, %arg7: memref<16x128xbf16, #tpu.memory_space<vmem>>) attributes {dimension_semantics = [#tpu.dimension_semantics<parallel>, #tpu.dimension_semantics<parallel>], iteration_bounds = array<i64: 1, 1>, scalar_prefetch = 0 : i64, scratch_operands = 0 : i64, tpu.core_type = #tpu.core_type<tc>, window_params = [{transform_indices = @transform_0, window_bounds = array<i64: 16, 32>}, {transform_indices = @transform_1, window_bounds = array<i64: 32, 128>}, {transform_indices = @transform_2, window_bounds = array<i64: 1, 128>}, {transform_indices = @transform_3, window_bounds = array<i64: 16, 1>}, {transform_indices = @transform_4, window_bounds = array<i64: 16, 128>}, {transform_indices = @transform_5, window_bounds = array<i64: 16, 128>}]} {
    %c0 = arith.constant 0 : index
    %c0_0 = arith.constant 0 : index
    %0 = vector.load %arg2[%c0, %c0_0] : memref<16x32xbf16, #tpu.memory_space<vmem>>, vector<16x32xbf16>
    %c0_1 = arith.constant 0 : index
    %c0_2 = arith.constant 0 : index
    %1 = vector.load %arg3[%c0_1, %c0_2] : memref<32x128xbf16, #tpu.memory_space<vmem>>, vector<32x128xbf16>
    %cst = arith.constant dense<0.000000e+00> : vector<16x128xf32>
    %2 = tpu.matmul %0, %1, %cst {dimension_numbers = #tpu.dot_dimension_numbers<[1], [0], [0], [1], [0, 0, 1, 1], [], []>} : vector<16x32xbf16>, vector<32x128xbf16>, vector<16x128xf32> -> vector<16x128xf32>
    %c0_3 = arith.constant 0 : index
    %c0_4 = arith.constant 0 : index
    %3 = vector.load %arg4[%c0_3, %c0_4] : memref<1x128xf32, #tpu.memory_space<vmem>>, vector<1x128xf32>
    %4 = vector.broadcast %3 : vector<1x128xf32> to vector<16x128xf32>
    %5 = arith.addf %2, %4 : vector<16x128xf32>
    %c0_5 = arith.constant 0 : index
    %c0_6 = arith.constant 0 : index
    %6 = vector.load %arg6[%c0_5, %c0_6] : memref<16x128xf32, #tpu.memory_space<vmem>>, vector<16x128xf32>
    tpu.vector_store %arg6[%c0_5, %c0_6], %5 {strides = array<i32>} : memref<16x128xf32, #tpu.memory_space<vmem>>, vector<16x128xf32>,
    %c128_i32 = arith.constant 128 : i32
    %7 = arith.muli %arg1, %c128_i32 : i32
    %8 = tpu.iota {dimensions = array<i32: 1>} : vector<16x128xi32>
    %9 = vector.broadcast %7 : i32 to vector<16x128xi32>
    %10 = arith.addi %9, %8 : vector<16x128xi32>
    %c0_7 = arith.constant 0 : index
    %c0_8 = arith.constant 0 : index
    %11 = vector.load %arg5[%c0_7, %c0_8] : memref<16x1xi32, #tpu.memory_space<vmem>>, vector<16x1xi32>
    %12 = vector.broadcast %11 : vector<16x1xi32> to vector<16x128xi32>
    %13 = arith.cmpi eq, %10, %12 : vector<16x128xi32>
    %14 = arith.extui %13 : vector<16x128xi1> to vector<16x128xi32>
    %15 = arith.sitofp %14 : vector<16x128xi32> to vector<16x128xf32>
    %16 = arith.truncf %15 : vector<16x128xf32> to vector<16x128xbf16>
    %c0_9 = arith.constant 0 : index
    %c0_10 = arith.constant 0 : index
    %17 = vector.load %arg7[%c0_9, %c0_10] : memref<16x128xbf16, #tpu.memory_space<vmem>>, vector<16x128xbf16>
    tpu.vector_store %arg7[%c0_9, %c0_10], %16 {strides = array<i32>} : memref<16x128xbf16, #tpu.memory_space<vmem>>, vector<16x128xbf16>,
    return
  }
  func.func @transform_0(%arg0: i32, %arg1: i32) -> (i32, i32) {
    %c0_i32 = arith.constant 0 : i32
    %c0_i32_0 = arith.constant 0 : i32
    return %arg0, %c0_i32 : i32, i32
  }
  func.func @transform_1(%arg0: i32, %arg1: i32) -> (i32, i32) {
    %c0_i32 = arith.constant 0 : i32
    %c0_i32_0 = arith.constant 0 : i32
    return %c0_i32, %arg1 : i32, i32
  }
  func.func @transform_2(%arg0: i32, %arg1: i32) -> (i32, i32) {
    %c0_i32 = arith.constant 0 : i32
    %c0_i32_0 = arith.constant 0 : i32
    return %c0_i32, %arg1 : i32, i32
  }
  func.func @transform_3(%arg0: i32, %arg1: i32) -> (i32, i32) {
    %c0_i32 = arith.constant 0 : i32
    %c0_i32_0 = arith.constant 0 : i32
    return %arg0, %c0_i32 : i32, i32
  }
  func.func @transform_4(%arg0: i32, %arg1: i32) -> (i32, i32) {
    %c0_i32 = arith.constant 0 : i32
    return %arg0, %arg1 : i32, i32
  }
  func.func @transform_5(%arg0: i32, %arg1: i32) -> (i32, i32) {
    %c0_i32 = arith.constant 0 : i32
    return %arg0, %arg1 : i32, i32
  }
}

</mosaic_0001>

<llo_original>
// kernel: tpu_custom_call.1
$region0: #{tpu_custom_call.1}
  #allocation0 [shape = 'u32[]', space=smem, size = 0x4, offset = 0x4, fixed_abs, tag = 'smem constant byte address 0x4 - core index']
  #allocation1 [shape = 'u32[144,128]{1,0:T(1,128)}', space=vmem, size = 0x12000, scoped, tag = 'internal scratch']
  %s0 = inlined_call_operand.hbm [shape: bf16[16,32], index: 0, kind: input, shape index: {}]
  %s1 = inlined_call_operand.vmem [shape: bf16[32,128], index: 1, kind: input, shape index: {}]
  %s2 = inlined_call_operand.vmem [shape: f32[1,128], index: 2, kind: input, shape index: {}]
  %s3 = inlined_call_operand.vmem [shape: s32[16,1], index: 3, kind: input, shape index: {}]
  %s4 = inlined_call_operand.hbm [shape: f32[16,128], index: 4, kind: output, shape index: {0}]
  %s5 = inlined_call_operand.hbm [shape: bf16[16,128], index: 5, kind: output, shape index: {1}]
  %6 = xla_tuple %s4, %s5
  %s7 = sld [smem:[#allocation0]]
  $region38: #{tpu_custom_call.1} parent=0
    _
  %s9 = ssub.s32 1, %s7
  %s10 = scalar_select 0, %s9, %s7
  $region1: #{tpu_custom_call.1} parent=0
    #allocation2 [shape = 'u8[4096]{0}', space=vmem, size = 0x1000, scoped, tag = 'input window, operand 0, single buffered']
    #allocation3 [shape = 's32[1]{0}', space=sflag, size = 0x4, scoped, tag = 'scoped memory for tpu_custom_call.1']
    #allocation4 [shape = 's32[1]{0}', space=sflag, size = 0x4, scoped, tag = 'scoped memory for tpu_custom_call.1']
    #allocation5 [shape = 'u8[8192]{0}', space=vmem, size = 0x2000, scoped, tag = 'output window, operand 0, single buffered']
    #allocation6 [shape = 'u8[4096]{0}', space=vmem, size = 0x1000, scoped, tag = 'output window, operand 1, single buffered']
    #allocation7 [shape = 's32[1]{0}', space=sflag, size = 0x4, scoped, tag = 'scoped memory for tpu_custom_call.1']
    %11 = vsyncpa [#allocation3], 0
    %12 = vsyncpa [#allocation4], 0
    %13 = vsyncpa [#allocation7], 0
    // Predicated region
    $region2: #{tpu_custom_call.1} parent=1 // pred_check
      _
    $region3: #{tpu_custom_call.1} parent=1 // pred_check_branch
      %15 = sbr.rel (0) target = $region5
    $region4: #{tpu_custom_call.1} parent=1 // pred_region
      %s17 = ssub.s32 128, 128
      %18 = vsyncadd [#allocation3], %s17
      %s19 = sshll.u32 [#allocation2], 4
      %s20 = int_to_ptr.vmem [resolvable:$true] %s19
      %25 = dma.hbm_to_vmem [thread:$0]  %s0, 128, %s20, [#allocation3], 64, 64, 4
    $region5: #{tpu_custom_call.1} parent=1 // pred_fallthru
      _
    // Predicated region
    $region6: #{tpu_custom_call.1} parent=1 // pred_check
      _
    $region7: #{tpu_custom_call.1} parent=1 // pred_check_branch
      %27 = sbr.rel (0) target = $region9
    $region8: #{tpu_custom_call.1} parent=1 // pred_region
      _
    $region9: #{tpu_custom_call.1} parent=1 // pred_fallthru
      _
    // Predicated region
    $region10: #{tpu_custom_call.1} parent=1 // pred_check
      _
    $region11: #{tpu_custom_call.1} parent=1 // pred_check_branch
      %29 = sbr.rel (0) target = $region13
    $region12: #{tpu_custom_call.1} parent=1 // pred_region
      _
    $region13: #{tpu_custom_call.1} parent=1 // pred_fallthru
      _
    // Predicated region
    $region14: #{tpu_custom_call.1} parent=1 // pred_check
      _
    $region15: #{tpu_custom_call.1} parent=1 // pred_check_branch
      %31 = sbr.rel (0) target = $region17
    $region16: #{tpu_custom_call.1} parent=1 // pred_region
      _
    $region17: #{tpu_custom_call.1} parent=1 // pred_fallthru
      _
    // Predicated region
    $region18: #{tpu_custom_call.1} parent=1 // pred_check
      _
    $region19: #{tpu_custom_call.1} parent=1 // pred_check_branch
      %33 = sbr.rel (0) target = $region21
    $region20: #{tpu_custom_call.1} parent=1 // pred_region
      %34 = dma.done [#allocation3], 128
    $region21: #{tpu_custom_call.1} parent=1 // pred_fallthru
      _
    %v36 = vld [vmem:[#allocation2] sm:$0xf]
    %v37 = vld [vmem:[#allocation2 + $0x4] sm:$0xf]
    %v38 = vld [vmem:[%s1] sm:$0xf]
    %v39 = vld [vmem:[%s1 + $0x4] sm:$0xf]
    %v40 = vld [vmem:[%s1 + $0x8] sm:$0xf]
    %v41 = vld [vmem:[%s1 + $0xc] sm:$0xf]
    %v42 = vld [vmem:[%s2] sm:$0x1]
    %v44 = vlaneseq
    %v45 = vshrl.u32 %v44, 7
    %v46 = vsub.s32 0, %v45
    %v47 = vrot.slane %v42, %v46
    %v51 = vunpack.c.l.b16 %v36
    %v52 = vunpack.c.l.b16 %v37
    %v53 = vpack.c.b16 %v52, %v51
    %v58 = vunpack.c.l.b16 %v38
    %v59 = vunpack.c.l.b16 %v39
    %v60 = vunpack.c.l.b16 %v40
    %v61 = vunpack.c.l.b16 %v41
    %v62 = vpack.c.b16 %v59, %v58
    %v63 = vpack.c.b16 %v61, %v60
    %vm66 = vcmask 261120
    %v68 = vsel %vm66, %v53, 0
    %70 = vmatprep.subr.bf16.mxu0 0
    %71 = vmatpush1.bf16.msra.mxu0 %v62
    %72 = vmatprep.subr.bf16.mxu0 0
    %73 = vmatpush1.bf16.msra.mxu0 %v63
    %74 = vmatprep.subr.bf16.mxu0 0
    %75 = vmatpush1.bf16.msra.mxu0 0
    %76 = vmatprep.subr.bf16.mxu0 0
    %77 = vmatpush1.bf16.msra.mxu0 0
    %78 = vmatprep.subr.bf16.mxu0 0
    %79 = vmatpush1.bf16.msra.mxu0 0
    %80 = vmatprep.subr.bf16.mxu0 0
    %81 = vmatpush1.bf16.msra.mxu0 0
    %82 = vmatprep.subr.bf16.mxu0 0
    %83 = vmatpush1.bf16.msra.mxu0 0
    %84 = vmatprep.subr.bf16.mxu0 0
    %85 = vmatpush1.bf16.msra.mxu0 0
    %86 = vmatprep.subr.bf16.mxu0 0
    %87 = vmatpush1.bf16.msra.mxu0 0
    %88 = vmatprep.subr.bf16.mxu0 0
    %89 = vmatpush1.bf16.msra.mxu0 0
    %90 = vmatprep.subr.bf16.mxu0 0
    %91 = vmatpush1.bf16.msra.mxu0 0
    %92 = vmatprep.subr.bf16.mxu0 0
    %93 = vmatpush1.bf16.msra.mxu0 0
    %94 = vmatprep.subr.bf16.mxu0 0
    %95 = vmatpush1.bf16.msra.mxu0 0
    %96 = vmatprep.subr.bf16.mxu0 0
    %97 = vmatpush1.bf16.msra.mxu0 0
    %98 = vmatprep.subr.bf16.mxu0 0
    %99 = vmatpush1.bf16.msra.mxu0 0
    %100 = vmatprep.subr.bf16.mxu0 0
    %101 = vmatpush1.bf16.msra.mxu0 0
    %102 = vmatprep.mubr.bf16.mxu0 0
    %103 = vmatmul.mubr.bf16.gmra.mrb[0].mxu0 %v68
    %v104 = vpop.f32.mrb[0].mxu0
    %v105 = vadd.f32 %v47, %v104
    %v106 = vpop.f32.mrb[0].mxu0
    %v107 = vpop.f32.mrb[0].mxu0
    %v108 = vadd.f32 %v47, %v107
    %v109 = vpop.f32.mrb[0].mxu0
    %110 = vdwg.mxu0
    %111 = vst [vmem:[#allocation5] sm:$0xff] %v105
    %112 = vst [vmem:[#allocation5 + $0x8] sm:$0xff] %v108
    %s113 = smul.u32 0, 128
    %v114 = vlaneseq
    %v115 = vand.u32 %v114, 127
    %v116 = vstv %s113
    %v117 = vadd.s32 %v116, %v115
    %v118 = vld [vmem:[%s3] sm:$0xff]
    %v119 = vld [vmem:[%s3 + $0x8] sm:$0xff]
    %120 = vset.pattern.permute.xlu0 0
    %121 = vperm.xlu0 %120, %v118
    %v122 = vpop.permute.xlu0 %121
    %123 = vset.pattern.permute.xlu0 0
    %124 = vperm.xlu0 %123, %v119
    %v125 = vpop.permute.xlu0 %124
    %vm126 = vcmp.eq.s32.totalorder %v117, %v122
    %vm127 = vcmp.eq.s32.totalorder %v117, %v125
    %v128 = vsel %vm126, 1, 0
    %v129 = vsel %vm127, 1, 0
    %v130 = vcvt.s32.f32 %v128
    %v131 = vcvt.s32.f32 %v129
    %v132 = vpack.c.bf16 %v131, %v130
    %v134 = vunpack.c.l.b16 %v132
    %v135 = vunpack.c.h.b16 %v132
    %v136 = vpack.c.b16 %v134, %v134
    %v137 = vpack.c.b16 %v135, %v135
    %140 = vst [vmem:[#allocation6] sm:$0xf] %v136
    %141 = vst [vmem:[#allocation6 + $0x4] sm:$0xf] %v137
    // Predicated region
    $region22: #{tpu_custom_call.1} parent=1 // pred_check
      _
    $region23: #{tpu_custom_call.1} parent=1 // pred_check_branch
      %143 = sbr.rel (0) target = $region25
    $region24: #{tpu_custom_call.1} parent=1 // pred_region
      %s145 = ssub.s32 256, 256
      %146 = vsyncadd [#allocation4], %s145
      %s147 = sshll.u32 [#allocation5], 4
      %s148 = int_to_ptr.vmem [resolvable:$true] %s147
      %153 = dma.vmem_to_hbm [thread:$0]  %s148, 256, %s4, [#allocation4], 128, 128, 8
    $region25: #{tpu_custom_call.1} parent=1 // pred_fallthru
      _
    // Predicated region
    $region26: #{tpu_custom_call.1} parent=1 // pred_check
      _
    $region27: #{tpu_custom_call.1} parent=1 // pred_check_branch
      %155 = sbr.rel (0) target = $region29
    $region28: #{tpu_custom_call.1} parent=1 // pred_region
      %s157 = ssub.s32 128, 128
      %158 = vsyncadd [#allocation7], %s157
      %s159 = sshll.u32 [#allocation6], 4
      %s160 = int_to_ptr.vmem [resolvable:$true] %s159
      %165 = dma.vmem_to_hbm [thread:$0]  %s160, 128, %s5, [#allocation7], 64, 64, 4
    $region29: #{tpu_custom_call.1} parent=1 // pred_fallthru
      _
    // Predicated region
    $region30: #{tpu_custom_call.1} parent=1 // pred_check
      _
    $region31: #{tpu_custom_call.1} parent=1 // pred_check_branch
      %167 = sbr.rel (0) target = $region33
    $region32: #{tpu_custom_call.1} parent=1 // pred_region
      %168 = dma.done [#allocation4], 256
    $region33: #{tpu_custom_call.1} parent=1 // pred_fallthru
      _
    // Predicated region
    $region34: #{tpu_custom_call.1} parent=1 // pred_check
      _
    $region35: #{tpu_custom_call.1} parent=1 // pred_check_branch
      %170 = sbr.rel (0) target = $region37
    $region36: #{tpu_custom_call.1} parent=1 // pred_region
      %171 = dma.done [#allocation7], 128
    $region37: #{tpu_custom_call.1} parent=1 // pred_fallthru
      _
    %172 = vsyncpa [#allocation3], 1
    %173 = vsyncpa [#allocation4], 1
    %174 = vsyncpa [#allocation7], 1

</llo_original>
